<compile_context>
chip_gen: v7x
topology: tpu7x:2x2x1
jax: 0.10.0
libtpu: 0.0.40
codegen_flags: <defaults>
</compile_context>

<pallas_src>
import functools

import jax
import jax.numpy as jnp
from jax.experimental import pallas as pl
from jax.experimental.pallas import tpu as pltpu

HIDDEN = 256
LANE = 128
SUBLANE_BF16 = 16          # bf16 sublane packing -> batch tiles multiple of 16
LOG_STD_MAX = 2.0
LOG_STD_MIN = -5.0


def _round_up(x, m):
    return ((x + m - 1) // m) * m


def _actor_kernel(x_ref, w1_ref, b1_ref, w2_ref, b2_ref, wh_ref, bh_ref,
                  out_ref, *, logstd_offset):
    """One batch-tile of the Actor MLP (fc1+relu, fc2+relu, packed heads).

    Output slab columns [0, A) hold mean, [logstd_offset, logstd_offset+A)
    hold log_std.  Matmuls are bf16 x bf16 on the MXU with f32 accumulation;
    the elementwise epilogue is f32.
    """
    # fc1 + relu
    h = jnp.dot(x_ref[...], w1_ref[...], preferred_element_type=jnp.float32)
    h = jnp.maximum(h + b1_ref[...], 0.0).astype(jnp.bfloat16)

    # fc2 + relu
    h = jnp.dot(h, w2_ref[...], preferred_element_type=jnp.float32)
    h = jnp.maximum(h + b2_ref[...], 0.0).astype(jnp.bfloat16)

    # packed heads: one lane-dense (tile, 128) matmul
    out = jnp.dot(h, wh_ref[...], preferred_element_type=jnp.float32) + bh_ref[...]

    # tanh + affine applies only to the log_std lanes.  tanh over the full
    # slab runs on the EUP (free slot); the lane-select is a single VPU where.
    col = jax.lax.broadcasted_iota(jnp.int32, out.shape, dimension=1)
    ls = LOG_STD_MIN + 0.5 * (LOG_STD_MAX - LOG_STD_MIN) * (jnp.tanh(out) + 1.0)
    out_ref[...] = jnp.where(col >= logstd_offset, ls, out).astype(out_ref.dtype)


def prepare_params(params):
    """One-time conversion of PyTorch-layout Actor params into kernel layout.

    Do this at init (or after each optimizer step), NOT inside the per-step
    forward path: it removes the zeros/scatter/cast XLA ops from the hot path.
    """
    w1, b1, w2, b2, wm, bm, wl, bl = params
    A = wm.shape[1]

    if 2 * A <= LANE:
        half, width = LANE // 2, LANE           # both heads in one 128-lane slab
    else:
        half = _round_up(A, LANE)               # large action spaces: fall back
        width = 2 * half

    wh = jnp.zeros((HIDDEN, width), jnp.float32)
    wh = wh.at[:, :A].set(wm).at[:, half:half + A].set(wl)
    bh = jnp.zeros((1, width), jnp.float32)
    bh = bh.at[:, :A].set(bm).at[:, half:half + A].set(bl)

    return dict(
        w1=w1.astype(jnp.bfloat16), b1=b1.reshape(1, HIDDEN).astype(jnp.float32),
        w2=w2.astype(jnp.bfloat16), b2=b2.reshape(1, HIDDEN).astype(jnp.float32),
        wh=wh.astype(jnp.bfloat16), bh=bh,
        act_dim=A, logstd_offset=half, head_width=width,
    )


def actor_forward(x, packed, *, batch_tile=None):
    """Pallas-backed Actor forward.

    x: (B, obs_dim) f32 -> (mean, log_std), each (B, act_dim) f32.
    `packed` comes from prepare_params().
    """
    B, D = x.shape
    A = packed["act_dim"]
    half = packed["logstd_offset"]
    width = packed["head_width"]

    # Batch tile selection:
    #  * never pad rollout-sized batches up to a huge tile (latency path),
    #  * default 512 amortizes per-step overhead on v5e/v6e training batches,
    #  * on v7x pass batch_tile ~= round_up(B,16)//2 for >=2 grid steps (2 TCs).
    B16 = _round_up(max(B, 1), SUBLANE_BF16)
    if batch_tile is None:
        batch_tile = 512
    batch_tile = _round_up(min(batch_tile, B16), SUBLANE_BF16)

    B_pad = _round_up(B, batch_tile)
    xb = x.astype(jnp.bfloat16)
    if B_pad != B:
        xb = jnp.pad(xb, ((0, B_pad - B), (0, 0)))

    grid = (B_pad // batch_tile,)

    flops = 2 * B_pad * (D * HIDDEN + HIDDEN * HIDDEN + HIDDEN * width)
    bytes_accessed = (
        2 * (B_pad * D + D * HIDDEN + HIDDEN * HIDDEN + HIDDEN * width)  # bf16
        + 4 * (2 * HIDDEN + width)                                       # f32 biases
        + 4 * B_pad * width)                                             # f32 output
    cost = pl.CostEstimate(flops=flops, transcendentals=B_pad * width,
                           bytes_accessed=bytes_accessed)

    kernel = functools.partial(_actor_kernel, logstd_offset=half)

    out = pl.pallas_call(
        kernel,
        out_shape=jax.ShapeDtypeStruct((B_pad, width), jnp.float32),
        grid_spec=pl.GridSpec(
            grid=grid,
            in_specs=[
                # activations: tiled over batch
                pl.BlockSpec((batch_tile, D), lambda i: (i, 0)),
                # weights / biases: full arrays, resident across all tiles
                pl.BlockSpec((D, HIDDEN), lambda i: (0, 0)),
                pl.BlockSpec((1, HIDDEN), lambda i: (0, 0)),
                pl.BlockSpec((HIDDEN, HIDDEN), lambda i: (0, 0)),
                pl.BlockSpec((1, HIDDEN), lambda i: (0, 0)),
                pl.BlockSpec((HIDDEN, width), lambda i: (0, 0)),
                pl.BlockSpec((1, width), lambda i: (0, 0)),
            ],
            out_specs=pl.BlockSpec((batch_tile, width), lambda i: (i, 0)),
        ),
        compiler_params=pltpu.CompilerParams(
            dimension_semantics=("parallel",)),
        cost_estimate=cost,
    )(xb, packed["w1"], packed["b1"], packed["w2"], packed["b2"],
      packed["wh"], packed["bh"])

    return out[:B, :A], out[:B, half:half + A]


def init_params(key, obs_dim, act_dim):
    """PyTorch-Linear-style init: U(-1/sqrt(fan_in), 1/sqrt(fan_in)).
    Weights stored as (in_features, out_features)."""
    keys = jax.random.split(key, 8)

    def linear(kw, kb, fan_in, fan_out):
        bound = 1.0 / jnp.sqrt(jnp.float32(fan_in))
        w = jax.random.uniform(kw, (fan_in, fan_out), jnp.float32, -bound, bound)
        b = jax.random.uniform(kb, (1, fan_out), jnp.float32, -bound, bound)
        return w, b

    w1, b1 = linear(keys[0], keys[1], obs_dim, HIDDEN)
    w2, b2 = linear(keys[2], keys[3], HIDDEN, HIDDEN)
    wm, bm = linear(keys[4], keys[5], HIDDEN, act_dim)   # fc_mean
    wl, bl = linear(keys[6], keys[7], HIDDEN, act_dim)   # fc_logstd
    return (w1, b1, w2, b2, wm, bm, wl, bl)


def actor_ref(x, params):
    """Pure-JAX f32 reference (mirrors Actor.forward exactly)."""
    w1, b1, w2, b2, wm, bm, wl, bl = params
    h = jax.nn.relu(x @ w1 + b1)
    h = jax.nn.relu(h @ w2 + b2)
    mean = h @ wm + bm
    log_std = jnp.tanh(h @ wl + bl)
    log_std = LOG_STD_MIN + 0.5 * (LOG_STD_MAX - LOG_STD_MIN) * (log_std + 1.0)
    return mean, log_std


# TODO(synk): Actor.get_action (Normal.rsample / log_prob, tanh squashing with
# action_scale/action_bias) is stochastic glue best left in plain JAX around
# this kernel; only forward() is implemented here.

if __name__ == "__main__":
    key = jax.random.PRNGKey(0)
    k_params, k_x, k_x2 = jax.random.split(key, 3)

    batch, obs_dim, act_dim = 2, 8, 4          # small env-like shapes
    params = init_params(k_params, obs_dim, act_dim)
    packed = prepare_params(params)            # one-time, outside the hot path

    # Rollout-sized call (tiny batch -> 16-row tile, single grid step).
    x = jax.random.normal(k_x, (batch, obs_dim), jnp.float32)
    mean, log_std = actor_forward(x, packed)
    jax.block_until_ready((mean, log_std))

    mean_ref, log_std_ref = actor_ref(x, params)
    assert mean.shape == (batch, act_dim), mean.shape
    assert log_std.shape == (batch, act_dim), log_std.shape
    # bf16 weights/activations vs f32 reference -> loosened tolerance.
    assert jnp.allclose(mean, mean_ref, atol=5e-2, rtol=5e-2)
    assert jnp.allclose(log_std, log_std_ref, atol=5e-2, rtol=5e-2)

    # Training-sized call with a multi-step grid (exercises batch tiling).
    xb = jax.random.normal(k_x2, (300, obs_dim), jnp.float32)
    mean_b, log_std_b = actor_forward(xb, packed, batch_tile=128)
    jax.block_until_ready((mean_b, log_std_b))
    mean_b_ref, log_std_b_ref = actor_ref(xb, params)
    assert mean_b.shape == (300, act_dim)
    assert jnp.allclose(mean_b, mean_b_ref, atol=5e-2, rtol=5e-2)
    assert jnp.allclose(log_std_b, log_std_b_ref, atol=5e-2, rtol=5e-2)

    print("KERNEL_OK")
</pallas_src>

<mosaic_0001>
module attributes {stable_mosaic.version = 11 : i64} {
  func.func @_actor_kernel(%arg0: i32, %arg1: memref<16x8xbf16, #tpu.memory_space<vmem>>, %arg2: memref<8x256xbf16, #tpu.memory_space<vmem>>, %arg3: memref<1x256xf32, #tpu.memory_space<vmem>>, %arg4: memref<256x256xbf16, #tpu.memory_space<vmem>>, %arg5: memref<1x256xf32, #tpu.memory_space<vmem>>, %arg6: memref<256x128xbf16, #tpu.memory_space<vmem>>, %arg7: memref<1x128xf32, #tpu.memory_space<vmem>>, %arg8: memref<16x128xf32, #tpu.memory_space<vmem>>) attributes {dimension_semantics = [#tpu.dimension_semantics<parallel>], iteration_bounds = array<i64: 1>, scalar_prefetch = 0 : i64, scratch_operands = 0 : i64, tpu.core_type = #tpu.core_type<tc>, window_params = [{transform_indices = @transform_0, window_bounds = array<i64: 16, 8>}, {pipeline_mode = #tpu.pipeline_mode<synchronous>, transform_indices = @transform_1, window_bounds = array<i64: 8, 256>}, {pipeline_mode = #tpu.pipeline_mode<synchronous>, transform_indices = @transform_2, window_bounds = array<i64: 1, 256>}, {pipeline_mode = #tpu.pipeline_mode<synchronous>, transform_indices = @transform_3, window_bounds = array<i64: 256, 256>}, {pipeline_mode = #tpu.pipeline_mode<synchronous>, transform_indices = @transform_4, window_bounds = array<i64: 1, 256>}, {pipeline_mode = #tpu.pipeline_mode<synchronous>, transform_indices = @transform_5, window_bounds = array<i64: 256, 128>}, {pipeline_mode = #tpu.pipeline_mode<synchronous>, transform_indices = @transform_6, window_bounds = array<i64: 1, 128>}, {transform_indices = @transform_7, window_bounds = array<i64: 16, 128>}]} {
    %c0 = arith.constant 0 : index
    %c0_0 = arith.constant 0 : index
    %0 = vector.load %arg1[%c0, %c0_0] : memref<16x8xbf16, #tpu.memory_space<vmem>>, vector<16x8xbf16>
    %c0_1 = arith.constant 0 : index
    %c0_2 = arith.constant 0 : index
    %1 = vector.load %arg2[%c0_1, %c0_2] : memref<8x256xbf16, #tpu.memory_space<vmem>>, vector<8x256xbf16>
    %cst = arith.constant dense<0.000000e+00> : vector<16x256xf32>
    %2 = tpu.matmul %0, %1, %cst {dimension_numbers = #tpu.dot_dimension_numbers<[1], [0], [0], [1], [0, 0, 1, 1], [], []>} : vector<16x8xbf16>, vector<8x256xbf16>, vector<16x256xf32> -> vector<16x256xf32>
    %c0_3 = arith.constant 0 : index
    %c0_4 = arith.constant 0 : index
    %3 = vector.load %arg3[%c0_3, %c0_4] : memref<1x256xf32, #tpu.memory_space<vmem>>, vector<1x256xf32>
    %4 = vector.broadcast %3 : vector<1x256xf32> to vector<16x256xf32>
    %5 = arith.addf %2, %4 : vector<16x256xf32>
    %cst_5 = arith.constant 0.000000e+00 : f32
    %6 = vector.broadcast %cst_5 : f32 to vector<16x256xf32>
    %7 = arith.maximumf %5, %6 : vector<16x256xf32>
    %8 = arith.truncf %7 : vector<16x256xf32> to vector<16x256xbf16>
    %c0_6 = arith.constant 0 : index
    %c0_7 = arith.constant 0 : index
    %9 = vector.load %arg4[%c0_6, %c0_7] : memref<256x256xbf16, #tpu.memory_space<vmem>>, vector<256x256xbf16>
    %cst_8 = arith.constant dense<0.000000e+00> : vector<16x256xf32>
    %10 = tpu.matmul %8, %9, %cst_8 {dimension_numbers = #tpu.dot_dimension_numbers<[1], [0], [0], [1], [0, 0, 1, 1], [], []>} : vector<16x256xbf16>, vector<256x256xbf16>, vector<16x256xf32> -> vector<16x256xf32>
    %c0_9 = arith.constant 0 : index
    %c0_10 = arith.constant 0 : index
    %11 = vector.load %arg5[%c0_9, %c0_10] : memref<1x256xf32, #tpu.memory_space<vmem>>, vector<1x256xf32>
    %12 = vector.broadcast %11 : vector<1x256xf32> to vector<16x256xf32>
    %13 = arith.addf %10, %12 : vector<16x256xf32>
    %cst_11 = arith.constant 0.000000e+00 : f32
    %14 = vector.broadcast %cst_11 : f32 to vector<16x256xf32>
    %15 = arith.maximumf %13, %14 : vector<16x256xf32>
    %16 = arith.truncf %15 : vector<16x256xf32> to vector<16x256xbf16>
    %c0_12 = arith.constant 0 : index
    %c0_13 = arith.constant 0 : index
    %17 = vector.load %arg6[%c0_12, %c0_13] : memref<256x128xbf16, #tpu.memory_space<vmem>>, vector<256x128xbf16>
    %cst_14 = arith.constant dense<0.000000e+00> : vector<16x128xf32>
    %18 = tpu.matmul %16, %17, %cst_14 {dimension_numbers = #tpu.dot_dimension_numbers<[1], [0], [0], [1], [0, 0, 1, 1], [], []>} : vector<16x256xbf16>, vector<256x128xbf16>, vector<16x128xf32> -> vector<16x128xf32>
    %c0_15 = arith.constant 0 : index
    %c0_16 = arith.constant 0 : index
    %19 = vector.load %arg7[%c0_15, %c0_16] : memref<1x128xf32, #tpu.memory_space<vmem>>, vector<1x128xf32>
    %20 = vector.broadcast %19 : vector<1x128xf32> to vector<16x128xf32>
    %21 = arith.addf %18, %20 : vector<16x128xf32>
    %22 = tpu.iota {dimensions = array<i32: 1>} : vector<16x128xi32>
    %23 = math.tanh %21 : vector<16x128xf32>
    %cst_17 = arith.constant 1.000000e+00 : f32
    %24 = vector.broadcast %cst_17 : f32 to vector<16x128xf32>
    %25 = arith.addf %23, %24 : vector<16x128xf32>
    %cst_18 = arith.constant 3.500000e+00 : f32
    %26 = vector.broadcast %cst_18 : f32 to vector<16x128xf32>
    %27 = arith.mulf %26, %25 : vector<16x128xf32>
    %cst_19 = arith.constant -5.000000e+00 : f32
    %28 = vector.broadcast %cst_19 : f32 to vector<16x128xf32>
    %29 = arith.addf %28, %27 : vector<16x128xf32>
    %c64_i32 = arith.constant 64 : i32
    %30 = vector.broadcast %c64_i32 : i32 to vector<16x128xi32>
    %31 = arith.cmpi sge, %22, %30 : vector<16x128xi32>
    %32 = arith.select %31, %29, %21 : vector<16x128xi1>, vector<16x128xf32>
    %c0_20 = arith.constant 0 : index
    %c0_21 = arith.constant 0 : index
    %33 = vector.load %arg8[%c0_20, %c0_21] : memref<16x128xf32, #tpu.memory_space<vmem>>, vector<16x128xf32>
    tpu.vector_store %arg8[%c0_20, %c0_21], %32 {strides = array<i32>} : memref<16x128xf32, #tpu.memory_space<vmem>>, vector<16x128xf32>,
    return
  }
  func.func @transform_0(%arg0: i32) -> (i32, i32) {
    %c0_i32 = arith.constant 0 : i32
    %c0_i32_0 = arith.constant 0 : i32
    return %arg0, %c0_i32 : i32, i32
  }
  func.func @transform_1(%arg0: i32) -> (i32, i32) {
    %c0_i32 = arith.constant 0 : i32
    %c0_i32_0 = arith.constant 0 : i32
    %c0_i32_1 = arith.constant 0 : i32
    return %c0_i32, %c0_i32_0 : i32, i32
  }
  func.func @transform_2(%arg0: i32) -> (i32, i32) {
    %c0_i32 = arith.constant 0 : i32
    %c0_i32_0 = arith.constant 0 : i32
    %c0_i32_1 = arith.constant 0 : i32
    return %c0_i32, %c0_i32_0 : i32, i32
  }
  func.func @transform_3(%arg0: i32) -> (i32, i32) {
    %c0_i32 = arith.constant 0 : i32
    %c0_i32_0 = arith.constant 0 : i32
    %c0_i32_1 = arith.constant 0 : i32
    return %c0_i32, %c0_i32_0 : i32, i32
  }
  func.func @transform_4(%arg0: i32) -> (i32, i32) {
    %c0_i32 = arith.constant 0 : i32
    %c0_i32_0 = arith.constant 0 : i32
    %c0_i32_1 = arith.constant 0 : i32
    return %c0_i32, %c0_i32_0 : i32, i32
  }
  func.func @transform_5(%arg0: i32) -> (i32, i32) {
    %c0_i32 = arith.constant 0 : i32
    %c0_i32_0 = arith.constant 0 : i32
    %c0_i32_1 = arith.constant 0 : i32
    return %c0_i32, %c0_i32_0 : i32, i32
  }
  func.func @transform_6(%arg0: i32) -> (i32, i32) {
    %c0_i32 = arith.constant 0 : i32
    %c0_i32_0 = arith.constant 0 : i32
    %c0_i32_1 = arith.constant 0 : i32
    return %c0_i32, %c0_i32_0 : i32, i32
  }
  func.func @transform_7(%arg0: i32) -> (i32, i32) {
    %c0_i32 = arith.constant 0 : i32
    %c0_i32_0 = arith.constant 0 : i32
    return %arg0, %c0_i32 : i32, i32
  }
}

</mosaic_0001>

<llo_original>
// kernel: tpu_custom_call.1
$region0: #{tpu_custom_call.1}
  #allocation0 [shape = 'u32[]', space=smem, size = 0x4, offset = 0x4, fixed_abs, tag = 'smem constant byte address 0x4 - core index']
  #allocation1 [shape = 'u32[144,128]{1,0:T(1,128)}', space=vmem, size = 0x12000, scoped, tag = 'internal scratch']
  %s0 = inlined_call_operand.vmem [shape: bf16[16,8], index: 0, kind: input, shape index: {}]
  %s1 = inlined_call_operand.vmem [shape: bf16[8,256], index: 1, kind: input, shape index: {}]
  %s2 = inlined_call_operand.vmem [shape: f32[1,256], index: 2, kind: input, shape index: {}]
  %s3 = inlined_call_operand.hbm [shape: bf16[256,256], index: 3, kind: input, shape index: {}]
  %s4 = inlined_call_operand.vmem [shape: f32[1,256], index: 4, kind: input, shape index: {}]
  %s5 = inlined_call_operand.hbm [shape: bf16[256,128], index: 5, kind: input, shape index: {}]
  %s6 = inlined_call_operand.vmem [shape: f32[1,128], index: 6, kind: input, shape index: {}]
  %s7 = inlined_call_operand.hbm [shape: f32[16,128], index: 7, kind: output, shape index: {}]
  %s8 = sld [smem:[#allocation0]]
  $region46: #{tpu_custom_call.1} parent=0
    _
  %s10 = ssub.s32 1, %s8
  %s11 = scalar_select 0, %s10, %s8
  $region1: #{tpu_custom_call.1} parent=0
    #allocation2 [shape = 'u8[131072]{0}', space=vmem, size = 0x20000, scoped, tag = 'input window, operand 3, single buffered']
    #allocation3 [shape = 's32[1]{0}', space=sflag, size = 0x4, scoped, tag = 'scoped memory for tpu_custom_call.1']
    #allocation4 [shape = 's32[1]{0}', space=sflag, size = 0x4, scoped, tag = 'scoped memory for tpu_custom_call.1']
    #allocation5 [shape = 'u8[65536]{0}', space=vmem, size = 0x10000, scoped, tag = 'input window, operand 5, single buffered']
    #allocation6 [shape = 's32[1]{0}', space=sflag, size = 0x4, scoped, tag = 'scoped memory for tpu_custom_call.1']
    #allocation7 [shape = 'u8[8192]{0}', space=vmem, size = 0x2000, scoped, tag = 'output window, operand 0, single buffered']
    %12 = vsyncpa [#allocation3], 0
    %13 = vsyncpa [#allocation6], 0
    %14 = vsyncpa [#allocation4], 0
    // Predicated region
    $region2: #{tpu_custom_call.1} parent=1 // pred_check
      _
    $region3: #{tpu_custom_call.1} parent=1 // pred_check_branch
      %16 = sbr.rel (0) target = $region5
    $region4: #{tpu_custom_call.1} parent=1 // pred_region
      _
    $region5: #{tpu_custom_call.1} parent=1 // pred_fallthru
      _
    // Predicated region
    $region6: #{tpu_custom_call.1} parent=1 // pred_check
      _
    $region7: #{tpu_custom_call.1} parent=1 // pred_check_branch
      %18 = sbr.rel (0) target = $region9
    $region8: #{tpu_custom_call.1} parent=1 // pred_region
      _
    $region9: #{tpu_custom_call.1} parent=1 // pred_fallthru
      _
    // Predicated region
    $region10: #{tpu_custom_call.1} parent=1 // pred_check
      _
    $region11: #{tpu_custom_call.1} parent=1 // pred_check_branch
      %20 = sbr.rel (0) target = $region13
    $region12: #{tpu_custom_call.1} parent=1 // pred_region
      _
    $region13: #{tpu_custom_call.1} parent=1 // pred_fallthru
      _
    // Predicated region
    $region14: #{tpu_custom_call.1} parent=1 // pred_check
      _
    $region15: #{tpu_custom_call.1} parent=1 // pred_check_branch
      %22 = sbr.rel (0) target = $region17
    $region16: #{tpu_custom_call.1} parent=1 // pred_region
      %s24 = ssub.s32 4096, 4096
      %25 = vsyncadd [#allocation3], %s24
      %s26 = sshll.u32 [#allocation2], 4
      %s27 = int_to_ptr.vmem [resolvable:$true] %s26
      %32 = dma.hbm_to_vmem [thread:$0]  %s3, 4096, %s27, [#allocation3], 128, 128, 8
    $region17: #{tpu_custom_call.1} parent=1 // pred_fallthru
      _
    // Predicated region
    $region18: #{tpu_custom_call.1} parent=1 // pred_check
      _
    $region19: #{tpu_custom_call.1} parent=1 // pred_check_branch
      %34 = sbr.rel (0) target = $region21
    $region20: #{tpu_custom_call.1} parent=1 // pred_region
      _
    $region21: #{tpu_custom_call.1} parent=1 // pred_fallthru
      _
    // Predicated region
    $region22: #{tpu_custom_call.1} parent=1 // pred_check
      _
    $region23: #{tpu_custom_call.1} parent=1 // pred_check_branch
      %36 = sbr.rel (0) target = $region25
    $region24: #{tpu_custom_call.1} parent=1 // pred_region
      %s38 = ssub.s32 2048, 2048
      %39 = vsyncadd [#allocation6], %s38
      %s40 = sshll.u32 [#allocation5], 4
      %s41 = int_to_ptr.vmem [resolvable:$true] %s40
      %46 = dma.hbm_to_vmem [thread:$0]  %s5, 2048, %s41, [#allocation6], 64, 64, 4
    $region25: #{tpu_custom_call.1} parent=1 // pred_fallthru
      _
    // Predicated region
    $region26: #{tpu_custom_call.1} parent=1 // pred_check
      _
    $region27: #{tpu_custom_call.1} parent=1 // pred_check_branch
      %48 = sbr.rel (0) target = $region29
    $region28: #{tpu_custom_call.1} parent=1 // pred_region
      _
    $region29: #{tpu_custom_call.1} parent=1 // pred_fallthru
      _
    // Predicated region
    $region30: #{tpu_custom_call.1} parent=1 // pred_check
      _
    $region31: #{tpu_custom_call.1} parent=1 // pred_check_branch
      %50 = sbr.rel (0) target = $region33
    $region32: #{tpu_custom_call.1} parent=1 // pred_region
      %51 = dma.done [#allocation3], 4096
    $region33: #{tpu_custom_call.1} parent=1 // pred_fallthru
      _
    // Predicated region
    $region34: #{tpu_custom_call.1} parent=1 // pred_check
      _
    $region35: #{tpu_custom_call.1} parent=1 // pred_check_branch
      %53 = sbr.rel (0) target = $region37
    $region36: #{tpu_custom_call.1} parent=1 // pred_region
      %54 = dma.done [#allocation6], 2048
    $region37: #{tpu_custom_call.1} parent=1 // pred_fallthru
      _
    %v56 = vld [vmem:[%s0] sm:$0xf]
    %v57 = vld [vmem:[%s0 + $0x4] sm:$0xf]
    %v58 = vld [vmem:[%s1] sm:$0xff]
    %v59 = vld [vmem:[%s2] sm:$0x3]
    %v61 = vlaneseq
    %v62 = vshrl.u32 %v61, 7
    %v63 = vsub.s32 0, %v62
    %v64 = vrot.slane %v59, %v63
    %v65 = vlaneseq
    %v66 = vshrl.u32 %v65, 7
    %v67 = vsub.s32 1, %v66
    %v68 = vrot.slane %v59, %v67
    %v73 = vunpack.c.l.b16 %v56
    %v74 = vunpack.c.l.b16 %v57
    %v75 = vpack.c.b16 %v74, %v73
    %v77 = vunpack.c.l.b16 %v58
    %v78 = vunpack.c.h.b16 %v58
    %v79 = vpack.c.b16 %v77, %v77
    %v80 = vpack.c.b16 %v78, %v78
    %vm81 = vcmask 64512
    %v83 = vsel %vm81, %v75, 0
    %vm85 = vcmask 1043456
    %v87 = vsel %vm85, %v79, 0
    %v90 = vsel %vm85, %v80, 0
    %92 = vmatprep.subr.bf16.mxu0 %v90
    %93 = vmatpush1.bf16.msra.mxu0 %v87
    %94 = vmatprep.subr.bf16.mxu0 0
    %95 = vmatpush1.bf16.msra.mxu0 0
    %96 = vmatprep.subr.bf16.mxu0 0
    %97 = vmatpush1.bf16.msra.mxu0 0
    %98 = vmatprep.subr.bf16.mxu0 0
    %99 = vmatpush1.bf16.msra.mxu0 0
    %100 = vmatprep.subr.bf16.mxu0 0
    %101 = vmatpush1.bf16.msra.mxu0 0
    %102 = vmatprep.subr.bf16.mxu0 0
    %103 = vmatpush1.bf16.msra.mxu0 0
    %104 = vmatprep.subr.bf16.mxu0 0
    %105 = vmatpush1.bf16.msra.mxu0 0
    %106 = vmatprep.subr.bf16.mxu0 0
    %107 = vmatpush1.bf16.msra.mxu0 0
    %108 = vmatprep.subr.bf16.mxu0 0
    %109 = vmatpush1.bf16.msra.mxu0 0
    %110 = vmatprep.subr.bf16.mxu0 0
    %111 = vmatpush1.bf16.msra.mxu0 0
    %112 = vmatprep.subr.bf16.mxu0 0
    %113 = vmatpush1.bf16.msra.mxu0 0
    %114 = vmatprep.subr.bf16.mxu0 0
    %115 = vmatpush1.bf16.msra.mxu0 0
    %116 = vmatprep.subr.bf16.mxu0 0
    %117 = vmatpush1.bf16.msra.mxu0 0
    %118 = vmatprep.subr.bf16.mxu0 0
    %119 = vmatpush1.bf16.msra.mxu0 0
    %120 = vmatprep.subr.bf16.mxu0 0
    %121 = vmatpush1.bf16.msra.mxu0 0
    %122 = vmatprep.subr.bf16.mxu0 0
    %123 = vmatpush1.bf16.msra.mxu0 0
    %124 = vmatprep.mubr.bf16.mxu0 0
    %125 = vmatmul.mubr.bf16.gmra.mrb[0].mxu0 %v83
    %v126 = vpop.f32.mrb[0].mxu0
    %v127 = vadd.f32 %v64, %v126
    %v128 = vpop.f32.mrb[0].mxu0
    %v129 = vadd.f32 %v68, %v128
    %v130 = vpop.f32.mrb[0].mxu0
    %v131 = vadd.f32 %v64, %v130
    %v132 = vpop.f32.mrb[0].mxu0
    %v133 = vadd.f32 %v68, %v132
    %134 = vdwg.mxu0
    %v135 = vmax.f32 %v127, 0.0
    %v136 = vmax.f32 %v129, 0.0
    %v137 = vmax.f32 %v131, 0.0
    %v138 = vmax.f32 %v133, 0.0
    %v139 = vpack.c.bf16 %v137, %v135
    %v140 = vpack.c.bf16 %v138, %v136
    %v141 = vld [vmem:[#allocation2] sm:$0xff]
    %v142 = vld [vmem:[#allocation2 + $0x8] sm:$0xff]
    %v143 = vld [vmem:[#allocation2 + $0x10] sm:$0xff]
    %v144 = vld [vmem:[#allocation2 + $0x18] sm:$0xff]
    %v145 = vld [vmem:[#allocation2 + $0x20] sm:$0xff]
    %v146 = vld [vmem:[#allocation2 + $0x28] sm:$0xff]
    %v147 = vld [vmem:[#allocation2 + $0x30] sm:$0xff]
    %v148 = vld [vmem:[#allocation2 + $0x38] sm:$0xff]
    %v149 = vld [vmem:[#allocation2 + $0x40] sm:$0xff]
    %v150 = vld [vmem:[#allocation2 + $0x48] sm:$0xff]
    %v151 = vld [vmem:[#allocation2 + $0x50] sm:$0xff]
    %v152 = vld [vmem:[#allocation2 + $0x58] sm:$0xff]
    %v153 = vld [vmem:[#allocation2 + $0x60] sm:$0xff]
    %v154 = vld [vmem:[#allocation2 + $0x68] sm:$0xff]
    %v155 = vld [vmem:[#allocation2 + $0x70] sm:$0xff]
    %v156 = vld [vmem:[#allocation2 + $0x78] sm:$0xff]
    %v157 = vld [vmem:[#allocation2 + $0x80] sm:$0xff]
    %v158 = vld [vmem:[#allocation2 + $0x88] sm:$0xff]
    %v159 = vld [vmem:[#allocation2 + $0x90] sm:$0xff]
    %v160 = vld [vmem:[#allocation2 + $0x98] sm:$0xff]
    %v161 = vld [vmem:[#allocation2 + $0xa0] sm:$0xff]
    %v162 = vld [vmem:[#allocation2 + $0xa8] sm:$0xff]
    %v163 = vld [vmem:[#allocation2 + $0xb0] sm:$0xff]
    %v164 = vld [vmem:[#allocation2 + $0xb8] sm:$0xff]
    %v165 = vld [vmem:[#allocation2 + $0xc0] sm:$0xff]
    %v166 = vld [vmem:[#allocation2 + $0xc8] sm:$0xff]
    %v167 = vld [vmem:[#allocation2 + $0xd0] sm:$0xff]
    %v168 = vld [vmem:[#allocation2 + $0xd8] sm:$0xff]
    %v169 = vld [vmem:[#allocation2 + $0xe0] sm:$0xff]
    %v170 = vld [vmem:[#allocation2 + $0xe8] sm:$0xff]
    %v171 = vld [vmem:[#allocation2 + $0xf0] sm:$0xff]
    %v172 = vld [vmem:[#allocation2 + $0xf8] sm:$0xff]
    %v173 = vld [vmem:[%s4] sm:$0x3]
    %v175 = vlaneseq
    %v176 = vshrl.u32 %v175, 7
    %v177 = vsub.s32 0, %v176
    %v178 = vrot.slane %v173, %v177
    %v179 = vlaneseq
    %v180 = vshrl.u32 %v179, 7
    %v181 = vsub.s32 1, %v180
    %v182 = vrot.slane %v173, %v181
    %v217 = vunpack.c.l.b16 %v141
    %v218 = vunpack.c.h.b16 %v141
    %v219 = vunpack.c.l.b16 %v142
    %v220 = vunpack.c.h.b16 %v142
    %v221 = vunpack.c.l.b16 %v143
    %v222 = vunpack.c.h.b16 %v143
    %v223 = vunpack.c.l.b16 %v144
    %v224 = vunpack.c.h.b16 %v144
    %v225 = vunpack.c.l.b16 %v145
    %v226 = vunpack.c.h.b16 %v145
    %v227 = vunpack.c.l.b16 %v146
    %v228 = vunpack.c.h.b16 %v146
    %v229 = vunpack.c.l.b16 %v147
    %v230 = vunpack.c.h.b16 %v147
    %v231 = vunpack.c.l.b16 %v148
    %v232 = vunpack.c.h.b16 %v148
    %v233 = vunpack.c.l.b16 %v149
    %v234 = vunpack.c.h.b16 %v149
    %v235 = vunpack.c.l.b16 %v150
    %v236 = vunpack.c.h.b16 %v150
    %v237 = vunpack.c.l.b16 %v151
    %v238 = vunpack.c.h.b16 %v151
    %v239 = vunpack.c.l.b16 %v152
    %v240 = vunpack.c.h.b16 %v152
    %v241 = vunpack.c.l.b16 %v153
    %v242 = vunpack.c.h.b16 %v153
    %v243 = vunpack.c.l.b16 %v154
    %v244 = vunpack.c.h.b16 %v154
    %v245 = vunpack.c.l.b16 %v155
    %v246 = vunpack.c.h.b16 %v155
    %v247 = vunpack.c.l.b16 %v156
    %v248 = vunpack.c.h.b16 %v156
    %v249 = vunpack.c.l.b16 %v157
    %v250 = vunpack.c.h.b16 %v157
    %v251 = vunpack.c.l.b16 %v158
    %v252 = vunpack.c.h.b16 %v158
    %v253 = vunpack.c.l.b16 %v159
    %v254 = vunpack.c.h.b16 %v159
    %v255 = vunpack.c.l.b16 %v160
    %v256 = vunpack.c.h.b16 %v160
    %v257 = vunpack.c.l.b16 %v161
    %v258 = vunpack.c.h.b16 %v161
    %v259 = vunpack.c.l.b16 %v162
    %v260 = vunpack.c.h.b16 %v162
    %v261 = vunpack.c.l.b16 %v163
    %v262 = vunpack.c.h.b16 %v163
    %v263 = vunpack.c.l.b16 %v164
    %v264 = vunpack.c.h.b16 %v164
    %v265 = vunpack.c.l.b16 %v165
    %v266 = vunpack.c.h.b16 %v165
    %v267 = vunpack.c.l.b16 %v166
    %v268 = vunpack.c.h.b16 %v166
    %v269 = vunpack.c.l.b16 %v167
    %v270 = vunpack.c.h.b16 %v167
    %v271 = vunpack.c.l.b16 %v168
    %v272 = vunpack.c.h.b16 %v168
    %v273 = vunpack.c.l.b16 %v169
    %v274 = vunpack.c.h.b16 %v169
    %v275 = vunpack.c.l.b16 %v170
    %v276 = vunpack.c.h.b16 %v170
    %v277 = vunpack.c.l.b16 %v171
    %v278 = vunpack.c.h.b16 %v171
    %v279 = vunpack.c.l.b16 %v172
    %v280 = vunpack.c.h.b16 %v172
    %v281 = vpack.c.b16 %v219, %v217
    %v282 = vpack.c.b16 %v220, %v218
    %v283 = vpack.c.b16 %v223, %v221
    %v284 = vpack.c.b16 %v224, %v222
    %v285 = vpack.c.b16 %v227, %v225
    %v286 = vpack.c.b16 %v228, %v226
    %v287 = vpack.c.b16 %v231, %v229
    %v288 = vpack.c.b16 %v232, %v230
    %v289 = vpack.c.b16 %v235, %v233
    %v290 = vpack.c.b16 %v236, %v234
    %v291 = vpack.c.b16 %v239, %v237
    %v292 = vpack.c.b16 %v240, %v238
    %v293 = vpack.c.b16 %v243, %v241
    %v294 = vpack.c.b16 %v244, %v242
    %v295 = vpack.c.b16 %v247, %v245
    %v296 = vpack.c.b16 %v248, %v246
    %v297 = vpack.c.b16 %v251, %v249
    %v298 = vpack.c.b16 %v252, %v250
    %v299 = vpack.c.b16 %v255, %v253
    %v300 = vpack.c.b16 %v256, %v254
    %v301 = vpack.c.b16 %v259, %v257
    %v302 = vpack.c.b16 %v260, %v258
    %v303 = vpack.c.b16 %v263, %v261
    %v304 = vpack.c.b16 %v264, %v262
    %v305 = vpack.c.b16 %v267, %v265
    %v306 = vpack.c.b16 %v268, %v266
    %v307 = vpack.c.b16 %v271, %v269
    %v308 = vpack.c.b16 %v272, %v270
    %v309 = vpack.c.b16 %v275, %v273
    %v310 = vpack.c.b16 %v276, %v274
    %v311 = vpack.c.b16 %v279, %v277
    %v312 = vpack.c.b16 %v280, %v278
    %345 = vmatprep.subr.bf16.mxu0 %v282
    %346 = vmatpush1.bf16.msra.mxu0 %v281
    %347 = vmatprep.subr.bf16.mxu0 %v284
    %348 = vmatpush1.bf16.msra.mxu0 %v283
    %349 = vmatprep.subr.bf16.mxu0 %v286
    %350 = vmatpush1.bf16.msra.mxu0 %v285
    %351 = vmatprep.subr.bf16.mxu0 %v288
    %352 = vmatpush1.bf16.msra.mxu0 %v287
    %353 = vmatprep.subr.bf16.mxu0 %v290
    %354 = vmatpush1.bf16.msra.mxu0 %v289
    %355 = vmatprep.subr.bf16.mxu0 %v292
    %356 = vmatpush1.bf16.msra.mxu0 %v291
    %357 = vmatprep.subr.bf16.mxu0 %v294
    %358 = vmatpush1.bf16.msra.mxu0 %v293
    %359 = vmatprep.subr.bf16.mxu0 %v296
    %360 = vmatpush1.bf16.msra.mxu0 %v295
    %361 = vmatprep.subr.bf16.mxu0 %v298
    %362 = vmatpush1.bf16.msra.mxu0 %v297
    %363 = vmatprep.subr.bf16.mxu0 %v300
    %364 = vmatpush1.bf16.msra.mxu0 %v299
    %365 = vmatprep.subr.bf16.mxu0 %v302
    %366 = vmatpush1.bf16.msra.mxu0 %v301
    %367 = vmatprep.subr.bf16.mxu0 %v304
    %368 = vmatpush1.bf16.msra.mxu0 %v303
    %369 = vmatprep.subr.bf16.mxu0 %v306
    %370 = vmatpush1.bf16.msra.mxu0 %v305
    %371 = vmatprep.subr.bf16.mxu0 %v308
    %372 = vmatpush1.bf16.msra.mxu0 %v307
    %373 = vmatprep.subr.bf16.mxu0 %v310
    %374 = vmatpush1.bf16.msra.mxu0 %v309
    %375 = vmatprep.subr.bf16.mxu0 %v312
    %376 = vmatpush1.bf16.msra.mxu0 %v311
    %377 = vmatprep.mubr.bf16.mxu0 %v140
    %378 = vmatmul.mubr.bf16.gmra.mrb[0].mxu0 %v139
    %v379 = vpop.f32.mrb[0].mxu0
    %v380 = vadd.f32 %v178, %v379
    %v381 = vpop.f32.mrb[0].mxu0
    %v382 = vadd.f32 %v182, %v381
    %v383 = vpop.f32.mrb[0].mxu0
    %v384 = vadd.f32 %v178, %v383
    %v385 = vpop.f32.mrb[0].mxu0
    %v386 = vadd.f32 %v182, %v385
    %387 = vdwg.mxu0
    %v388 = vmax.f32 %v380, 0.0
    %v389 = vmax.f32 %v382, 0.0
    %v390 = vmax.f32 %v384, 0.0
    %v391 = vmax.f32 %v386, 0.0
    %v392 = vpack.c.bf16 %v390, %v388
    %v393 = vpack.c.bf16 %v391, %v389
    %v394 = vld [vmem:[#allocation5] sm:$0xf]
    %v395 = vld [vmem:[#allocation5 + $0x4] sm:$0xf]
    %v396 = vld [vmem:[#allocation5 + $0x8] sm:$0xf]
    %v397 = vld [vmem:[#allocation5 + $0xc] sm:$0xf]
    %v398 = vld [vmem:[#allocation5 + $0x10] sm:$0xf]
    %v399 = vld [vmem:[#allocation5 + $0x14] sm:$0xf]
    %v400 = vld [vmem:[#allocation5 + $0x18] sm:$0xf]
    %v401 = vld [vmem:[#allocation5 + $0x1c] sm:$0xf]
    %v402 = vld [vmem:[#allocation5 + $0x20] sm:$0xf]
    %v403 = vld [vmem:[#allocation5 + $0x24] sm:$0xf]
    %v404 = vld [vmem:[#allocation5 + $0x28] sm:$0xf]
    %v405 = vld [vmem:[#allocation5 + $0x2c] sm:$0xf]
    %v406 = vld [vmem:[#allocation5 + $0x30] sm:$0xf]
    %v407 = vld [vmem:[#allocation5 + $0x34] sm:$0xf]
    %v408 = vld [vmem:[#allocation5 + $0x38] sm:$0xf]
    %v409 = vld [vmem:[#allocation5 + $0x3c] sm:$0xf]
    %v410 = vld [vmem:[#allocation5 + $0x40] sm:$0xf]
    %v411 = vld [vmem:[#allocation5 + $0x44] sm:$0xf]
    %v412 = vld [vmem:[#allocation5 + $0x48] sm:$0xf]
    %v413 = vld [vmem:[#allocation5 + $0x4c] sm:$0xf]
    %v414 = vld [vmem:[#allocation5 + $0x50] sm:$0xf]
    %v415 = vld [vmem:[#allocation5 + $0x54] sm:$0xf]
    %v416 = vld [vmem:[#allocation5 + $0x58] sm:$0xf]
    %v417 = vld [vmem:[#allocation5 + $0x5c] sm:$0xf]
    %v418 = vld [vmem:[#allocation5 + $0x60] sm:$0xf]
    %v419 = vld [vmem:[#allocation5 + $0x64] sm:$0xf]
    %v420 = vld [vmem:[#allocation5 + $0x68] sm:$0xf]
    %v421 = vld [vmem:[#allocation5 + $0x6c] sm:$0xf]
    %v422 = vld [vmem:[#allocation5 + $0x70] sm:$0xf]
    %v423 = vld [vmem:[#allocation5 + $0x74] sm:$0xf]
    %v424 = vld [vmem:[#allocation5 + $0x78] sm:$0xf]
    %v425 = vld [vmem:[#allocation5 + $0x7c] sm:$0xf]
    %v426 = vld [vmem:[%s6] sm:$0x1]
    %v428 = vlaneseq
    %v429 = vshrl.u32 %v428, 7
    %v430 = vsub.s32 0, %v429
    %v431 = vrot.slane %v426, %v430
    %v465 = vunpack.c.l.b16 %v394
    %v466 = vunpack.c.l.b16 %v395
    %v467 = vunpack.c.l.b16 %v396
    %v468 = vunpack.c.l.b16 %v397
    %v469 = vunpack.c.l.b16 %v398
    %v470 = vunpack.c.l.b16 %v399
    %v471 = vunpack.c.l.b16 %v400
    %v472 = vunpack.c.l.b16 %v401
    %v473 = vunpack.c.l.b16 %v402
    %v474 = vunpack.c.l.b16 %v403
    %v475 = vunpack.c.l.b16 %v404
    %v476 = vunpack.c.l.b16 %v405
    %v477 = vunpack.c.l.b16 %v406
    %v478 = vunpack.c.l.b16 %v407
    %v479 = vunpack.c.l.b16 %v408
    %v480 = vunpack.c.l.b16 %v409
    %v481 = vunpack.c.l.b16 %v410
    %v482 = vunpack.c.l.b16 %v411
    %v483 = vunpack.c.l.b16 %v412
    %v484 = vunpack.c.l.b16 %v413
    %v485 = vunpack.c.l.b16 %v414
    %v486 = vunpack.c.l.b16 %v415
    %v487 = vunpack.c.l.b16 %v416
    %v488 = vunpack.c.l.b16 %v417
    %v489 = vunpack.c.l.b16 %v418
    %v490 = vunpack.c.l.b16 %v419
    %v491 = vunpack.c.l.b16 %v420
    %v492 = vunpack.c.l.b16 %v421
    %v493 = vunpack.c.l.b16 %v422
    %v494 = vunpack.c.l.b16 %v423
    %v495 = vunpack.c.l.b16 %v424
    %v496 = vunpack.c.l.b16 %v425
    %v497 = vpack.c.b16 %v466, %v465
    %v498 = vpack.c.b16 %v468, %v467
    %v499 = vpack.c.b16 %v470, %v469
    %v500 = vpack.c.b16 %v472, %v471
    %v501 = vpack.c.b16 %v474, %v473
    %v502 = vpack.c.b16 %v476, %v475
    %v503 = vpack.c.b16 %v478, %v477
    %v504 = vpack.c.b16 %v480, %v479
    %v505 = vpack.c.b16 %v482, %v481
    %v506 = vpack.c.b16 %v484, %v483
    %v507 = vpack.c.b16 %v486, %v485
    %v508 = vpack.c.b16 %v488, %v487
    %v509 = vpack.c.b16 %v490, %v489
    %v510 = vpack.c.b16 %v492, %v491
    %v511 = vpack.c.b16 %v494, %v493
    %v512 = vpack.c.b16 %v496, %v495
    %529 = vmatprep.subr.bf16.mxu0 0
    %530 = vmatpush1.bf16.msra.mxu0 %v497
    %531 = vmatprep.subr.bf16.mxu0 0
    %532 = vmatpush1.bf16.msra.mxu0 %v498
    %533 = vmatprep.subr.bf16.mxu0 0
    %534 = vmatpush1.bf16.msra.mxu0 %v499
    %535 = vmatprep.subr.bf16.mxu0 0
    %536 = vmatpush1.bf16.msra.mxu0 %v500
    %537 = vmatprep.subr.bf16.mxu0 0
    %538 = vmatpush1.bf16.msra.mxu0 %v501
    %539 = vmatprep.subr.bf16.mxu0 0
    %540 = vmatpush1.bf16.msra.mxu0 %v502
    %541 = vmatprep.subr.bf16.mxu0 0
    %542 = vmatpush1.bf16.msra.mxu0 %v503
    %543 = vmatprep.subr.bf16.mxu0 0
    %544 = vmatpush1.bf16.msra.mxu0 %v504
    %545 = vmatprep.subr.bf16.mxu0 0
    %546 = vmatpush1.bf16.msra.mxu0 %v505
    %547 = vmatprep.subr.bf16.mxu0 0
    %548 = vmatpush1.bf16.msra.mxu0 %v506
    %549 = vmatprep.subr.bf16.mxu0 0
    %550 = vmatpush1.bf16.msra.mxu0 %v507
    %551 = vmatprep.subr.bf16.mxu0 0
    %552 = vmatpush1.bf16.msra.mxu0 %v508
    %553 = vmatprep.subr.bf16.mxu0 0
    %554 = vmatpush1.bf16.msra.mxu0 %v509
    %555 = vmatprep.subr.bf16.mxu0 0
    %556 = vmatpush1.bf16.msra.mxu0 %v510
    %557 = vmatprep.subr.bf16.mxu0 0
    %558 = vmatpush1.bf16.msra.mxu0 %v511
    %559 = vmatprep.subr.bf16.mxu0 0
    %560 = vmatpush1.bf16.msra.mxu0 %v512
    %561 = vmatprep.mubr.bf16.mxu0 %v393
    %562 = vmatmul.mubr.bf16.gmra.mrb[0].mxu0 %v392
    %v563 = vpop.f32.mrb[0].mxu0
    %v564 = vadd.f32 %v431, %v563
    %v565 = vpop.f32.mrb[0].mxu0
    %v566 = vpop.f32.mrb[0].mxu0
    %v567 = vadd.f32 %v431, %v566
    %v568 = vpop.f32.mrb[0].mxu0
    %569 = vdwg.mxu0
    %v570 = vlaneseq
    %v571 = vand.u32 %v570, 127
    %v572 = vtanh.pop %v564
    %v573 = vtanh.pop %v567
    %v574 = vadd.f32 %v572, 1.0
    %v575 = vadd.f32 %v573, 1.0
    %v576 = vmul.f32 %v574, 3.5
    %v577 = vmul.f32 %v575, 3.5
    %v578 = vadd.f32 %v576, -5.0
    %v579 = vadd.f32 %v577, -5.0
    %vm580 = vcmp.ge.s32.totalorder %v571, 64
    %v581 = vsel %vm580, %v578, %v564
    %v582 = vsel %vm580, %v579, %v567
    %583 = vst [vmem:[#allocation7] sm:$0xff] %v581
    %584 = vst [vmem:[#allocation7 + $0x8] sm:$0xff] %v582
    // Predicated region
    $region38: #{tpu_custom_call.1} parent=1 // pred_check
      _
    $region39: #{tpu_custom_call.1} parent=1 // pred_check_branch
      %586 = sbr.rel (0) target = $region41
    $region40: #{tpu_custom_call.1} parent=1 // pred_region
      %s588 = ssub.s32 256, 256
      %589 = vsyncadd [#allocation4], %s588
      %s590 = sshll.u32 [#allocation7], 4
      %s591 = int_to_ptr.vmem [resolvable:$true] %s590
      %596 = dma.vmem_to_hbm [thread:$0]  %s591, 256, %s7, [#allocation4], 128, 128, 8
    $region41: #{tpu_custom_call.1} parent=1 // pred_fallthru
      _
    // Predicated region
    $region42: #{tpu_custom_call.1} parent=1 // pred_check
      _
    $region43: #{tpu_custom_call.1} parent=1 // pred_check_branch
      %598 = sbr.rel (0) target = $region45
    $region44: #{tpu_custom_call.1} parent=1 // pred_region
      %599 = dma.done [#allocation4], 256
    $region45: #{tpu_custom_call.1} parent=1 // pred_fallthru
      _
    %600 = vsyncpa [#allocation3], 1
    %601 = vsyncpa [#allocation6], 1
    %602 = vsyncpa [#allocation4], 1

</llo_original>
